<compile_context>
chip_gen: v5e
topology: v5e:2x2
jax: 0.10.0
libtpu: 0.0.40
codegen_flags: <defaults>
</compile_context>

<pallas_src>
import jax
import jax.numpy as jnp
from jax.experimental import pallas as pl
from jax.experimental.pallas import tpu as pltpu


_MAX_INFLIGHT_DMAS = 4
_TARGET_CHUNK_BYTES = 4 * 1024 * 1024  # aim for >= ~4 MiB per DMA chunk


def _make_hbm_copy_kernel(chunks):
    """Build a kernel that copies static (row_start, n_rows) chunks of the input
    HBM ref into the output HBM ref via direct HBM->HBM DMAs (no VMEM staging)."""

    def kernel(x_hbm, o_hbm, sem):
        # Issue every chunk first (kept in flight), then wait on all of them.
        for i, (start, size) in enumerate(chunks):
            pltpu.make_async_copy(
                x_hbm.at[pl.ds(start, size)],
                o_hbm.at[pl.ds(start, size)],
                sem.at[i],
            ).start()
        for i, (start, size) in enumerate(chunks):
            pltpu.make_async_copy(
                x_hbm.at[pl.ds(start, size)],
                o_hbm.at[pl.ds(start, size)],
                sem.at[i],
            ).wait()

    return kernel


def _plan_row_chunks(n_rows, row_bytes, max_inflight):
    """Split the leading axis into up to `max_inflight` contiguous row chunks."""
    total_bytes = int(n_rows) * int(row_bytes)
    if max_inflight is None:
        max_inflight = min(_MAX_INFLIGHT_DMAS,
                           max(1, total_bytes // _TARGET_CHUNK_BYTES))
    n_chunks = int(max(1, min(max_inflight, n_rows)))
    base = -(-n_rows // n_chunks)  # ceil division
    chunks = []
    start = 0
    while start < n_rows:
        size = min(base, n_rows - start)
        chunks.append((int(start), int(size)))
        start += size
    return tuple(chunks)


def _materialized_copy(x, max_inflight_dmas=None):
    shape = x.shape
    n_rows = shape[0]
    row_elems = 1
    for d in shape[1:]:
        row_elems *= d
    row_bytes = row_elems * x.dtype.itemsize
    chunks = _plan_row_chunks(n_rows, row_bytes, max_inflight_dmas)

    return pl.pallas_call(
        _make_hbm_copy_kernel(chunks),
        out_shape=jax.ShapeDtypeStruct(shape, x.dtype),
        in_specs=[pl.BlockSpec(memory_space=pl.ANY)],   # raw HBM ref, no auto-DMA
        out_specs=pl.BlockSpec(memory_space=pl.ANY),    # output stays in HBM
        scratch_shapes=[pltpu.SemaphoreType.DMA((len(chunks),))],
    )(x)


def identity_map(x: jax.Array, *args, force_copy: bool = False,
                 max_inflight_dmas=None, **kwargs) -> jax.Array:
    """Pallas equivalent of IdentityMap.forward(x, *args, **kwargs) -> x.

    Default path: return x unchanged (identity is a trace-time no-op; any kernel
    launch would be pure overhead).  Set force_copy=True to materialize a fresh
    HBM buffer via chunked HBM->HBM DMAs.
    """
    del args, kwargs  # IdentityMap ignores extra positional/keyword args.
    if not force_copy:
        return x
    if x.ndim == 0 or x.size == 0:
        # Nothing a DMA can usefully move; identity semantics are already met.
        return x
    return _materialized_copy(x, max_inflight_dmas)


class IdentityMap:
    """Object-style wrapper mirroring the PyTorch nn.Module."""

    def __call__(self, x, *args, **kwargs):
        return identity_map(x, *args, **kwargs)

    forward = __call__  # parity with torch's .forward()

    @property
    def config(self):
        return {"mm_projector_type": "identity"}


if __name__ == "__main__":
    key = jax.random.PRNGKey(0)
    # Shape consistent with a multimodal-projector input: (batch, seq, hidden).
    x = jax.random.normal(key, (2, 8, 32), dtype=jnp.float32)

    # 1) Default path: pure passthrough -- no kernel launch at all.
    y0 = identity_map(x, "ignored_positional_arg", some_kwarg=123)
    y0 = jax.block_until_ready(y0)
    assert y0.shape == x.shape and y0.dtype == x.dtype
    assert bool(jnp.array_equal(y0, x))

    # 2) Forced materialized copy: single HBM->HBM DMA (array smaller than one chunk).
    y1 = identity_map(x, force_copy=True)
    y1 = jax.block_until_ready(y1)
    assert y1.shape == x.shape and y1.dtype == x.dtype
    assert bool(jnp.array_equal(y1, x))

    # 3) Forced copy, bf16, several DMA chunks in flight along the leading axis.
    x2 = jax.random.normal(jax.random.PRNGKey(0), (6, 8, 256), dtype=jnp.bfloat16)
    y2 = identity_map(x2, force_copy=True, max_inflight_dmas=3)
    y2 = jax.block_until_ready(y2)
    assert y2.shape == x2.shape and y2.dtype == x2.dtype
    assert bool(jnp.array_equal(y2, x2))

    # 4) Module-style wrapper + config metadata (matches the torch @property).
    mod = IdentityMap()
    y3 = jax.block_until_ready(mod(x, "extra_arg", another_kwarg=None))
    assert bool(jnp.array_equal(y3, x))
    assert mod.config == {"mm_projector_type": "identity"}

    print("KERNEL_OK")
</pallas_src>

<mosaic_0001>
module attributes {stable_mosaic.version = 11 : i64} {
  func.func @kernel(%arg0: memref<2x8x32xf32, #tpu.memory_space<any>>, %arg1: memref<2x8x32xf32, #tpu.memory_space<any>>, %arg2: memref<1x!tpu.dma_semaphore, #tpu.memory_space<semaphore_mem>>) attributes {dimension_semantics = [], scalar_prefetch = 0 : i64, scratch_operands = 1 : i64, tpu.core_type = #tpu.core_type<tc>} {
    %c0_i32 = arith.constant 0 : i32
    %c0_i32_0 = arith.constant 0 : i32
    %c0_i32_1 = arith.constant 0 : i32
    %c0_i32_2 = arith.constant 0 : i32
    %0 = tpu.memref_slice %arg0[%c0_i32_0, %c0_i32_1, %c0_i32_2] : memref<2x8x32xf32, #tpu.memory_space<any>> -> memref<2x8x32xf32, #tpu.memory_space<any>>
    %c0_i32_3 = arith.constant 0 : i32
    %c0_i32_4 = arith.constant 0 : i32
    %c0_i32_5 = arith.constant 0 : i32
    %1 = tpu.memref_slice %arg1[%c0_i32_3, %c0_i32_4, %c0_i32_5] : memref<2x8x32xf32, #tpu.memory_space<any>> -> memref<2x8x32xf32, #tpu.memory_space<any>>
    %2 = tpu.memref_slice %arg2[%c0_i32] : memref<1x!tpu.dma_semaphore, #tpu.memory_space<semaphore_mem>> -> memref<1x!tpu.dma_semaphore, #tpu.memory_space<semaphore_mem>>
    %3 = tpu.memref_squeeze %2 : memref<1x!tpu.dma_semaphore, #tpu.memory_space<semaphore_mem>> -> memref<!tpu.dma_semaphore, #tpu.memory_space<semaphore_mem>>
    tpu.enqueue_dma source(%0 : memref<2x8x32xf32, #tpu.memory_space<any>>) target(%1 : memref<2x8x32xf32, #tpu.memory_space<any>>) target_semaphore(%3 : memref<!tpu.dma_semaphore, #tpu.memory_space<semaphore_mem>>)
    %c0_i32_6 = arith.constant 0 : i32
    %c0_i32_7 = arith.constant 0 : i32
    %c0_i32_8 = arith.constant 0 : i32
    %c0_i32_9 = arith.constant 0 : i32
    %4 = tpu.memref_slice %arg0[%c0_i32_7, %c0_i32_8, %c0_i32_9] : memref<2x8x32xf32, #tpu.memory_space<any>> -> memref<2x8x32xf32, #tpu.memory_space<any>>
    %c0_i32_10 = arith.constant 0 : i32
    %c0_i32_11 = arith.constant 0 : i32
    %c0_i32_12 = arith.constant 0 : i32
    %5 = tpu.memref_slice %arg1[%c0_i32_10, %c0_i32_11, %c0_i32_12] : memref<2x8x32xf32, #tpu.memory_space<any>> -> memref<2x8x32xf32, #tpu.memory_space<any>>
    %6 = tpu.memref_slice %arg2[%c0_i32_6] : memref<1x!tpu.dma_semaphore, #tpu.memory_space<semaphore_mem>> -> memref<1x!tpu.dma_semaphore, #tpu.memory_space<semaphore_mem>>
    %7 = tpu.memref_squeeze %6 : memref<1x!tpu.dma_semaphore, #tpu.memory_space<semaphore_mem>> -> memref<!tpu.dma_semaphore, #tpu.memory_space<semaphore_mem>>
    tpu.wait_dma2 semaphore(%7 : memref<!tpu.dma_semaphore, #tpu.memory_space<semaphore_mem>>) src(%4 : memref<2x8x32xf32, #tpu.memory_space<any>>) dst(%5 : memref<2x8x32xf32, #tpu.memory_space<any>>)
    return
  }
}

</mosaic_0001>

<llo_original>
// kernel: tpu_custom_call.1
$region0: #{tpu_custom_call.1}
  #allocation0 [shape = 'u32[]', space=smem, size = 0x4, offset = 0x4, fixed_abs, tag = 'smem constant byte address 0x4 - core index']
  #allocation1 [shape = 'u32[72,128]{1,0:T(1,128)}', space=vmem, size = 0x9000, scoped, tag = 'internal scratch']
  #allocation2 [shape = 's32[1]{0}', space=sflag, size = 0x4, scoped, tag = 'scratch operand']
  #allocation3 [shape = 's32[]', space=sflag, size = 0x4, offset = 0, fixed_abs, tag = 'sflag constant byte address 0x0 - dummy sync flag']
  #allocation4 [shape = 'u32[0]{0}', space=smem, size = 0, offset = 0, fixed_abs, tag = 'smem constant byte address 0x0 - null']
  %s0 = inlined_call_operand.hbm [shape: f32[2,8,32], index: 0, kind: input, shape index: {}]
  %s1 = inlined_call_operand.hbm [shape: f32[2,8,32], index: 1, kind: output, shape index: {}]
  %s2 = sld [smem:[#allocation0]]
  $region2: #{tpu_custom_call.1} parent=0
    _
  %s4 = ssub.s32 1, %s2
  %s5 = scalar_select 0, %s4, %s2
  %s7 = sshll.u32 1, 14
  %s8 = sxor.u32 4294967295, %s7
  %s10 = sshll.u32 %s0, 4
  %s11 = int_to_ptr.hbm [resolvable:$true] %s10
  %s12 = sshll.u32 %s1, 4
  %s13 = int_to_ptr.hbm [resolvable:$true] %s12
  %16 = dma.general %s11, 256, %s13, [#allocation2], [#allocation3], [#allocation4], 0, 0
  %s17 = smul.u32 2, 8
  %s18 = smul.u32 %s17, 1
  %s19 = sshll.u32 %s18, 4
  %20 = dma.done [#allocation2], %s19
  %21 = vsyncmov [#allocation2]
  %s22 = vpop.sfrf %21
  %p23 = scmp.eq.s32.totalorder %s22, 0
  %p24 = pneg %p23
  %26 = shalt.err (%p24)

</llo_original>
